<compile_context>
chip_gen: v7x
topology: tpu7x:2x2x1
jax: 0.10.0
libtpu: 0.0.40
codegen_flags: <defaults>
</compile_context>

<pallas_src>
import functools

import jax
import jax.numpy as jnp
from jax import lax
from jax.experimental import pallas as pl
from jax.experimental.pallas import tpu as pltpu


def _conv_projection_kernel(*refs, ts, halo, ksize, left_pad, has_left,
                            has_right, eps, approx_silu):
    it = iter(refs)
    x_ref = next(it)
    xl_ref = next(it) if has_left else None
    xr_ref = next(it) if has_right else None
    w_ref, b_ref, g_ref, beta_ref, o_ref, xwin_ref = tuple(it)

    s = pl.program_id(1)
    n_s = pl.num_programs(1)
    right_pad = ksize - 1 - left_pad
    c2 = xwin_ref.shape[1]
    zdtype = xwin_ref.dtype

    # ---- Stage the activation tile + halos into one aligned VMEM window so
    #      every tap below is a uniform full-height matmul at a static offset.
    xwin_ref[pl.ds(halo, ts), :] = x_ref[0]

    if left_pad > 0:
        zeros = jnp.zeros((halo, c2), zdtype)
        if has_left:
            @pl.when(s > 0)
            def _():
                xwin_ref[pl.ds(0, halo), :] = xl_ref[0]

            @pl.when(s == 0)
            def _():
                xwin_ref[pl.ds(0, halo), :] = zeros
        else:
            xwin_ref[pl.ds(0, halo), :] = zeros

    if right_pad > 0:
        zeros = jnp.zeros((halo, c2), zdtype)
        if has_right:
            @pl.when(s < n_s - 1)
            def _():
                xwin_ref[pl.ds(halo + ts, halo), :] = xr_ref[0]

            @pl.when(s == n_s - 1)
            def _():
                xwin_ref[pl.ds(halo + ts, halo), :] = zeros
        else:
            xwin_ref[pl.ds(halo + ts, halo), :] = zeros

    # ---- K taps, value-chain f32 accumulation (MXU chaining / MRB on v7x).
    #      'same' zero padding falls out of the zeroed halo rows.
    acc = None
    for k in range(ksize):
        d = k - left_pad                    # static tap shift
        t = jnp.dot(xwin_ref[pl.ds(halo + d, ts), :], w_ref[k],
                    preferred_element_type=jnp.float32)
        acc = t if acc is None else acc + t

    # Conv bias folded in once (broadcast over rows).
    y = acc + b_ref[...].astype(jnp.float32)

    # SiLU.  For low-precision outputs push the divide to the EUP via the
    # approximate reciprocal; keep the exact sigmoid for f32 accuracy.
    if approx_silu:
        e = jnp.exp(-jnp.maximum(y, -60.0))
        y = y * pl.reciprocal(1.0 + e, approx=True)
    else:
        y = y * jax.nn.sigmoid(y)

    # Two-pass (centered) LayerNorm over the hidden axis, all in f32.
    mean = jnp.mean(y, axis=-1, keepdims=True)
    centered = y - mean
    var = jnp.mean(centered * centered, axis=-1, keepdims=True)
    out = centered * lax.rsqrt(var + eps)
    out = out * g_ref[...].astype(jnp.float32) + beta_ref[...].astype(jnp.float32)
    # Output is lane-dense whenever H % 128 == 0 (the typical model config).
    # TODO(synk): pad H to a multiple of 128 in-kernel (with masked LN stats)
    # for odd hidden sizes to avoid masked vst.msk partial stores.
    o_ref[0] = out.astype(o_ref.dtype)


def _pick_seq_tile(S, target, halo, batch):
    """Largest multiple-of-`halo` divisor of S <= target, preferring configs
    with enough grid steps for v7x dual-core sharding / DMA pipelining."""
    divisors = [d for d in range(halo, S + 1, halo) if S % d == 0]
    if not divisors:
        # TODO(synk): masked remainder tile instead of a whole-S fallback.
        return S
    fitting = [d for d in divisors if d <= target] or [min(divisors)]
    ts = max(fitting)
    if batch * (S // ts) < 8:
        better = [d for d in fitting
                  if batch * (S // d) >= 8 and d >= min(256, ts)]
        if better:
            ts = max(better)
    return ts


def conv_projection(x, conv_w, conv_b, ln_w, ln_b, *, kernel_size, eps=1e-12,
                    seq_tile=512):
    """x: (B, S, 2H) channels-last.  conv_w: (H, 2H, K) (PyTorch OIW layout)."""
    B, S, C2 = x.shape
    H, Cin, K = conv_w.shape
    assert Cin == C2 == 2 * H and K == kernel_size

    # PyTorch padding='same' (stride=1, dilation=1): total = K-1; left = total//2
    total_pad = K - 1
    left_pad = total_pad // 2
    right_pad = total_pad - left_pad

    # Halo rows: align to the packed sublane tile (16 for <=16-bit dtypes,
    # 8 for f32) so halo DMAs and staging writes stay unmasked.
    halo = 8 if jnp.dtype(x.dtype).itemsize >= 4 else 16
    assert max(left_pad, right_pad) <= halo, "kernel_size too large for halo"

    TS = _pick_seq_tile(S, seq_tile, halo, B)
    nS = S // TS
    has_halo = nS > 1
    has_left = has_halo and left_pad > 0
    has_right = has_halo and right_pad > 0
    if has_halo:
        assert TS % halo == 0
    TSB = TS // halo if has_halo else 1   # seq-tile size in halo-row blocks
    SH = S // halo if has_halo else 1     # number of halo-row blocks along seq

    # Per-tap weight matrices (K, 2H, H), kept in the caller's dtype so the
    # MXU runs at its native rate with f32 accumulation.
    w_taps = jnp.transpose(conv_w, (2, 1, 0))
    b2d = conv_b.reshape(1, H)
    g2d = ln_w.reshape(1, H)
    beta2d = ln_b.reshape(1, H)

    approx_silu = jnp.dtype(x.dtype).itemsize < 4

    kernel = functools.partial(
        _conv_projection_kernel, ts=TS, halo=halo, ksize=K, left_pad=left_pad,
        has_left=has_left, has_right=has_right, eps=eps, approx_silu=approx_silu)

    # Constant-index operands: fetch once, single-buffered (no duplicate copy).
    resident = pl.Buffered(1)

    in_specs = [pl.BlockSpec((1, TS, C2), lambda b, s: (b, s, 0))]
    inputs = [x]
    if has_left:
        # Previous tile's last `halo` rows of the SAME unpadded input
        # (clamped index at the true left boundary; unused there).
        in_specs.append(pl.BlockSpec(
            (1, halo, C2), lambda b, s: (b, jnp.maximum(s * TSB - 1, 0), 0)))
        inputs.append(x)
    if has_right:
        # Next tile's first `halo` rows (clamped at the true right boundary).
        in_specs.append(pl.BlockSpec(
            (1, halo, C2), lambda b, s: (b, jnp.minimum((s + 1) * TSB, SH - 1), 0)))
        inputs.append(x)
    in_specs += [
        pl.BlockSpec((K, C2, H), lambda b, s: (0, 0, 0), pipeline_mode=resident),
        pl.BlockSpec((1, H), lambda b, s: (0, 0), pipeline_mode=resident),
        pl.BlockSpec((1, H), lambda b, s: (0, 0), pipeline_mode=resident),
        pl.BlockSpec((1, H), lambda b, s: (0, 0), pipeline_mode=resident),
    ]
    inputs += [w_taps, b2d, g2d, beta2d]

    # Scoped-VMEM limit from the actual per-step buffers (+headroom) instead of
    # the 16/32 MiB default.
    xb = jnp.dtype(x.dtype).itemsize
    wb = jnp.dtype(w_taps.dtype).itemsize
    pb = jnp.dtype(conv_b.dtype).itemsize
    est = (2 * TS * C2 * xb                                    # x tile, 2-buffered
           + (2 * halo * C2 * xb if has_left else 0)           # left halo
           + (2 * halo * C2 * xb if has_right else 0)          # right halo
           + 2 * TS * H * xb                                   # out tile, 2-buffered
           + K * C2 * H * wb                                   # resident weights (x1)
           + 3 * H * pb                                        # bias / gamma / beta
           + (TS + 2 * halo) * C2 * xb)                        # staging scratch
    vmem_limit = int(min(100 * 2 ** 20, max(16 * 2 ** 20, 2 * est)))
    # TODO(synk): add an output-channel (H) grid axis if resident weights alone
    # exceed ~20-24 MiB (v7x 64 MiB budget).

    return pl.pallas_call(
        kernel,
        out_shape=jax.ShapeDtypeStruct((B, S, H), x.dtype),
        grid_spec=pltpu.PrefetchScalarGridSpec(
            num_scalar_prefetch=0,
            grid=(B, nS),
            in_specs=in_specs,
            out_specs=pl.BlockSpec((1, TS, H), lambda b, s: (b, s, 0)),
            scratch_shapes=[pltpu.VMEM((TS + 2 * halo, C2), x.dtype)],
        ),
        compiler_params=pltpu.CompilerParams(
            dimension_semantics=("parallel", "parallel"),
            vmem_limit_bytes=vmem_limit),
    )(*inputs)


def _reference(x, conv_w, conv_b, ln_w, ln_b, *, eps=1e-12):
    """Pure-JAX reference matching the PyTorch module exactly."""
    K = conv_w.shape[-1]
    total_pad = K - 1
    left_pad = total_pad // 2
    right_pad = total_pad - left_pad
    x_ncw = jnp.transpose(x, (0, 2, 1))                    # b m c -> b c m
    y = jax.lax.conv_general_dilated(
        x_ncw, conv_w, window_strides=(1,), padding=[(left_pad, right_pad)],
        dimension_numbers=("NCH", "OIH", "NCH"))
    y = y + conv_b[None, :, None]
    y = y * jax.nn.sigmoid(y)                              # SiLU
    y = jnp.transpose(y, (0, 2, 1))                        # b c m -> b m c
    mean = jnp.mean(y, axis=-1, keepdims=True)
    var = jnp.mean(jnp.square(y - mean), axis=-1, keepdims=True)
    return (y - mean) * jax.lax.rsqrt(var + eps) * ln_w + ln_b


if __name__ == "__main__":
    eps = 1e-12
    key = jax.random.PRNGKey(0)
    k_x, k_w, k_b, k_x2 = jax.random.split(key, 4)

    # Test 1: small shapes consistent with the module (single seq tile).
    B, S, H, K = 2, 8, 32, 4
    x = jax.random.normal(k_x, (B, S, 2 * H), dtype=jnp.float32)
    conv_w = jax.random.normal(k_w, (H, 2 * H, K), dtype=jnp.float32) * 0.05
    conv_b = jax.random.normal(k_b, (H,), dtype=jnp.float32) * 0.05
    ln_w = jnp.ones((H,), dtype=jnp.float32)   # LayerNorm default init
    ln_b = jnp.zeros((H,), dtype=jnp.float32)

    out = conv_projection(x, conv_w, conv_b, ln_w, ln_b, kernel_size=K, eps=eps)
    out = jax.block_until_ready(out)
    ref = _reference(x, conv_w, conv_b, ln_w, ln_b, eps=eps)
    assert out.shape == (B, S, H)
    assert jnp.allclose(out, ref, atol=1e-4, rtol=1e-4), "mismatch (single tile)"

    # Test 2: longer sequence with a small seq_tile so the halo'd multi-tile
    # path (staging window, neighbour-tile halos, boundary zeroing) runs.
    S2 = 32
    x2 = jax.random.normal(k_x2, (B, S2, 2 * H), dtype=jnp.float32)
    out2 = conv_projection(x2, conv_w, conv_b, ln_w, ln_b, kernel_size=K,
                           eps=eps, seq_tile=8)
    out2 = jax.block_until_ready(out2)
    ref2 = _reference(x2, conv_w, conv_b, ln_w, ln_b, eps=eps)
    assert out2.shape == (B, S2, H)
    assert jnp.allclose(out2, ref2, atol=1e-4, rtol=1e-4), "mismatch (tiled seq)"

    # Test 3: bf16 inputs — 16-row halos, bf16 MXU operands with f32
    # accumulation, and the EUP approximate-reciprocal SiLU path.
    H3, S3, K3 = 128, 64, 4
    kx3, kw3, kb3 = jax.random.split(jax.random.PRNGKey(1), 3)
    x3 = jax.random.normal(kx3, (B, S3, 2 * H3), dtype=jnp.float32).astype(jnp.bfloat16)
    w3 = (jax.random.normal(kw3, (H3, 2 * H3, K3), dtype=jnp.float32) * 0.05
          ).astype(jnp.bfloat16)
    b3 = (jax.random.normal(kb3, (H3,), dtype=jnp.float32) * 0.05
          ).astype(jnp.bfloat16)
    g3 = jnp.ones((H3,), jnp.bfloat16)
    beta3 = jnp.zeros((H3,), jnp.bfloat16)
    out3 = conv_projection(x3, w3, b3, g3, beta3, kernel_size=K3, eps=eps,
                           seq_tile=32)
    out3 = jax.block_until_ready(out3)
    ref3 = _reference(x3.astype(jnp.float32), w3.astype(jnp.float32),
                      b3.astype(jnp.float32), g3.astype(jnp.float32),
                      beta3.astype(jnp.float32), eps=eps)
    assert out3.shape == (B, S3, H3)
    assert jnp.allclose(out3.astype(jnp.float32), ref3, atol=3e-2, rtol=3e-2), \
        "mismatch (bf16 tiled)"

    print("KERNEL_OK")
</pallas_src>

<mosaic_0001>
module attributes {stable_mosaic.version = 11 : i64} {
  func.func @_conv_projection_kernel(%arg0: i32, %arg1: i32, %arg2: memref<1x8x64xf32, #tpu.memory_space<vmem>>, %arg3: memref<4x64x32xf32, #tpu.memory_space<vmem>>, %arg4: memref<1x32xf32, #tpu.memory_space<vmem>>, %arg5: memref<1x32xf32, #tpu.memory_space<vmem>>, %arg6: memref<1x32xf32, #tpu.memory_space<vmem>>, %arg7: memref<1x8x32xf32, #tpu.memory_space<vmem>>, %arg8: memref<24x64xf32, #tpu.memory_space<vmem>>) attributes {dimension_semantics = [#tpu.dimension_semantics<parallel>, #tpu.dimension_semantics<parallel>], iteration_bounds = array<i64: 2, 1>, scalar_prefetch = 0 : i64, scratch_operands = 1 : i64, tpu.core_type = #tpu.core_type<tc>, window_params = [{transform_indices = @transform_0, window_bounds = array<i64: 1, 8, 64>}, {pipeline_mode = #tpu.pipeline_mode<synchronous>, transform_indices = @transform_1, window_bounds = array<i64: 4, 64, 32>}, {pipeline_mode = #tpu.pipeline_mode<synchronous>, transform_indices = @transform_2, window_bounds = array<i64: 1, 32>}, {pipeline_mode = #tpu.pipeline_mode<synchronous>, transform_indices = @transform_3, window_bounds = array<i64: 1, 32>}, {pipeline_mode = #tpu.pipeline_mode<synchronous>, transform_indices = @transform_4, window_bounds = array<i64: 1, 32>}, {transform_indices = @transform_5, window_bounds = array<i64: 1, 8, 32>}]} {
    %c0 = arith.constant 0 : index
    %c0_0 = arith.constant 0 : index
    %c0_1 = arith.constant 0 : index
    %0 = vector.load %arg2[%c0, %c0_0, %c0_1] : memref<1x8x64xf32, #tpu.memory_space<vmem>>, vector<1x8x64xf32>
    %1 = vector.shape_cast %0 : vector<1x8x64xf32> to vector<8x64xf32>
    %c8 = arith.constant 8 : index
    %c0_2 = arith.constant 0 : index
    %2 = vector.load %arg8[%c8, %c0_2] : memref<24x64xf32, #tpu.memory_space<vmem>>, vector<8x64xf32>
    tpu.vector_store %arg8[%c8, %c0_2], %1 {strides = array<i32>} : memref<24x64xf32, #tpu.memory_space<vmem>>, vector<8x64xf32>,
    %cst = arith.constant 0.000000e+00 : f32
    %3 = vector.broadcast %cst : f32 to vector<8x64xf32>
    %c0_3 = arith.constant 0 : index
    %c0_4 = arith.constant 0 : index
    %4 = vector.load %arg8[%c0_3, %c0_4] : memref<24x64xf32, #tpu.memory_space<vmem>>, vector<8x64xf32>
    tpu.vector_store %arg8[%c0_3, %c0_4], %3 {strides = array<i32>} : memref<24x64xf32, #tpu.memory_space<vmem>>, vector<8x64xf32>,
    %cst_5 = arith.constant 0.000000e+00 : f32
    %5 = vector.broadcast %cst_5 : f32 to vector<8x64xf32>
    %c16 = arith.constant 16 : index
    %c0_6 = arith.constant 0 : index
    %6 = vector.load %arg8[%c16, %c0_6] : memref<24x64xf32, #tpu.memory_space<vmem>>, vector<8x64xf32>
    tpu.vector_store %arg8[%c16, %c0_6], %5 {strides = array<i32>} : memref<24x64xf32, #tpu.memory_space<vmem>>, vector<8x64xf32>,
    %c7 = arith.constant 7 : index
    %c0_7 = arith.constant 0 : index
    %7 = vector.load %arg8[%c7, %c0_7] : memref<24x64xf32, #tpu.memory_space<vmem>>, vector<8x64xf32>
    %c0_8 = arith.constant 0 : index
    %c0_9 = arith.constant 0 : index
    %c0_10 = arith.constant 0 : index
    %8 = vector.load %arg3[%c0_8, %c0_9, %c0_10] : memref<4x64x32xf32, #tpu.memory_space<vmem>>, vector<1x64x32xf32>
    %9 = vector.shape_cast %8 : vector<1x64x32xf32> to vector<64x32xf32>
    %cst_11 = arith.constant dense<0.000000e+00> : vector<8x32xf32>
    %10 = tpu.matmul %7, %9, %cst_11 {dimension_numbers = #tpu.dot_dimension_numbers<[1], [0], [0], [1], [0, 0, 1, 1], [], []>} : vector<8x64xf32>, vector<64x32xf32>, vector<8x32xf32> -> vector<8x32xf32>
    %c8_12 = arith.constant 8 : index
    %c0_13 = arith.constant 0 : index
    %11 = vector.load %arg8[%c8_12, %c0_13] : memref<24x64xf32, #tpu.memory_space<vmem>>, vector<8x64xf32>
    %c1 = arith.constant 1 : index
    %c0_14 = arith.constant 0 : index
    %c0_15 = arith.constant 0 : index
    %12 = vector.load %arg3[%c1, %c0_14, %c0_15] : memref<4x64x32xf32, #tpu.memory_space<vmem>>, vector<1x64x32xf32>
    %13 = vector.shape_cast %12 : vector<1x64x32xf32> to vector<64x32xf32>
    %cst_16 = arith.constant dense<0.000000e+00> : vector<8x32xf32>
    %14 = tpu.matmul %11, %13, %cst_16 {dimension_numbers = #tpu.dot_dimension_numbers<[1], [0], [0], [1], [0, 0, 1, 1], [], []>} : vector<8x64xf32>, vector<64x32xf32>, vector<8x32xf32> -> vector<8x32xf32>
    %15 = arith.addf %10, %14 : vector<8x32xf32>
    %c9 = arith.constant 9 : index
    %c0_17 = arith.constant 0 : index
    %16 = vector.load %arg8[%c9, %c0_17] : memref<24x64xf32, #tpu.memory_space<vmem>>, vector<8x64xf32>
    %c2 = arith.constant 2 : index
    %c0_18 = arith.constant 0 : index
    %c0_19 = arith.constant 0 : index
    %17 = vector.load %arg3[%c2, %c0_18, %c0_19] : memref<4x64x32xf32, #tpu.memory_space<vmem>>, vector<1x64x32xf32>
    %18 = vector.shape_cast %17 : vector<1x64x32xf32> to vector<64x32xf32>
    %cst_20 = arith.constant dense<0.000000e+00> : vector<8x32xf32>
    %19 = tpu.matmul %16, %18, %cst_20 {dimension_numbers = #tpu.dot_dimension_numbers<[1], [0], [0], [1], [0, 0, 1, 1], [], []>} : vector<8x64xf32>, vector<64x32xf32>, vector<8x32xf32> -> vector<8x32xf32>
    %20 = arith.addf %15, %19 : vector<8x32xf32>
    %c10 = arith.constant 10 : index
    %c0_21 = arith.constant 0 : index
    %21 = vector.load %arg8[%c10, %c0_21] : memref<24x64xf32, #tpu.memory_space<vmem>>, vector<8x64xf32>
    %c3 = arith.constant 3 : index
    %c0_22 = arith.constant 0 : index
    %c0_23 = arith.constant 0 : index
    %22 = vector.load %arg3[%c3, %c0_22, %c0_23] : memref<4x64x32xf32, #tpu.memory_space<vmem>>, vector<1x64x32xf32>
    %23 = vector.shape_cast %22 : vector<1x64x32xf32> to vector<64x32xf32>
    %cst_24 = arith.constant dense<0.000000e+00> : vector<8x32xf32>
    %24 = tpu.matmul %21, %23, %cst_24 {dimension_numbers = #tpu.dot_dimension_numbers<[1], [0], [0], [1], [0, 0, 1, 1], [], []>} : vector<8x64xf32>, vector<64x32xf32>, vector<8x32xf32> -> vector<8x32xf32>
    %25 = arith.addf %20, %24 : vector<8x32xf32>
    %c0_25 = arith.constant 0 : index
    %c0_26 = arith.constant 0 : index
    %26 = vector.load %arg4[%c0_25, %c0_26] : memref<1x32xf32, #tpu.memory_space<vmem>>, vector<1x32xf32>
    %27 = vector.broadcast %26 : vector<1x32xf32> to vector<8x32xf32>
    %28 = arith.addf %25, %27 : vector<8x32xf32>
    %29 = arith.negf %28 : vector<8x32xf32>
    %30 = math.exp %29 : vector<8x32xf32>
    %cst_27 = arith.constant 1.000000e+00 : f32
    %31 = vector.broadcast %cst_27 : f32 to vector<8x32xf32>
    %32 = arith.addf %31, %30 : vector<8x32xf32>
    %33 = arith.divf %31, %32 : vector<8x32xf32>
    %34 = arith.mulf %28, %33 : vector<8x32xf32>
    %cst_28 = arith.constant dense<0.000000e+00> : vector<8xf32>
    %35 = vector.multi_reduction <add>, %34, %cst_28 [1] : vector<8x32xf32> to vector<8xf32>
    %36 = vector.shape_cast %35 : vector<8xf32> to vector<8x1xf32>
    %cst_29 = arith.constant 3.200000e+01 : f32
    %37 = vector.broadcast %cst_29 : f32 to vector<8x1xf32>
    %38 = arith.divf %36, %37 : vector<8x1xf32>
    %39 = vector.broadcast %38 : vector<8x1xf32> to vector<8x32xf32>
    %40 = arith.subf %34, %39 : vector<8x32xf32>
    %41 = arith.mulf %40, %40 : vector<8x32xf32>
    %cst_30 = arith.constant dense<0.000000e+00> : vector<8xf32>
    %42 = vector.multi_reduction <add>, %41, %cst_30 [1] : vector<8x32xf32> to vector<8xf32>
    %43 = vector.shape_cast %42 : vector<8xf32> to vector<8x1xf32>
    %cst_31 = arith.constant 3.200000e+01 : f32
    %44 = vector.broadcast %cst_31 : f32 to vector<8x1xf32>
    %45 = arith.divf %43, %44 : vector<8x1xf32>
    %cst_32 = arith.constant 9.99999996E-13 : f32
    %46 = vector.broadcast %cst_32 : f32 to vector<8x1xf32>
    %47 = arith.addf %45, %46 : vector<8x1xf32>
    %48 = math.rsqrt %47 : vector<8x1xf32>
    %49 = vector.broadcast %48 : vector<8x1xf32> to vector<8x32xf32>
    %50 = arith.mulf %40, %49 : vector<8x32xf32>
    %c0_33 = arith.constant 0 : index
    %c0_34 = arith.constant 0 : index
    %51 = vector.load %arg5[%c0_33, %c0_34] : memref<1x32xf32, #tpu.memory_space<vmem>>, vector<1x32xf32>
    %52 = vector.broadcast %51 : vector<1x32xf32> to vector<8x32xf32>
    %53 = arith.mulf %50, %52 : vector<8x32xf32>
    %c0_35 = arith.constant 0 : index
    %c0_36 = arith.constant 0 : index
    %54 = vector.load %arg6[%c0_35, %c0_36] : memref<1x32xf32, #tpu.memory_space<vmem>>, vector<1x32xf32>
    %55 = vector.broadcast %54 : vector<1x32xf32> to vector<8x32xf32>
    %56 = arith.addf %53, %55 : vector<8x32xf32>
    %c0_37 = arith.constant 0 : index
    %c0_38 = arith.constant 0 : index
    %c0_39 = arith.constant 0 : index
    %57 = vector.load %arg7[%c0_37, %c0_38, %c0_39] : memref<1x8x32xf32, #tpu.memory_space<vmem>>, vector<1x8x32xf32>
    %58 = vector.shape_cast %57 : vector<1x8x32xf32> to vector<8x32xf32>
    %59 = vector.shape_cast %56 : vector<8x32xf32> to vector<1x8x32xf32>
    tpu.vector_store %arg7[%c0_37, %c0_38, %c0_39], %59 {strides = array<i32>} : memref<1x8x32xf32, #tpu.memory_space<vmem>>, vector<1x8x32xf32>,
    return
  }
  func.func @transform_0(%arg0: i32, %arg1: i32) -> (i32, i32, i32) {
    %c0_i32 = arith.constant 0 : i32
    %c0_i32_0 = arith.constant 0 : i32
    return %arg0, %arg1, %c0_i32 : i32, i32, i32
  }
  func.func @transform_1(%arg0: i32, %arg1: i32) -> (i32, i32, i32) {
    %c0_i32 = arith.constant 0 : i32
    %c0_i32_0 = arith.constant 0 : i32
    %c0_i32_1 = arith.constant 0 : i32
    %c0_i32_2 = arith.constant 0 : i32
    return %c0_i32, %c0_i32_0, %c0_i32_1 : i32, i32, i32
  }
  func.func @transform_2(%arg0: i32, %arg1: i32) -> (i32, i32) {
    %c0_i32 = arith.constant 0 : i32
    %c0_i32_0 = arith.constant 0 : i32
    %c0_i32_1 = arith.constant 0 : i32
    return %c0_i32, %c0_i32_0 : i32, i32
  }
  func.func @transform_3(%arg0: i32, %arg1: i32) -> (i32, i32) {
    %c0_i32 = arith.constant 0 : i32
    %c0_i32_0 = arith.constant 0 : i32
    %c0_i32_1 = arith.constant 0 : i32
    return %c0_i32, %c0_i32_0 : i32, i32
  }
  func.func @transform_4(%arg0: i32, %arg1: i32) -> (i32, i32) {
    %c0_i32 = arith.constant 0 : i32
    %c0_i32_0 = arith.constant 0 : i32
    %c0_i32_1 = arith.constant 0 : i32
    return %c0_i32, %c0_i32_0 : i32, i32
  }
  func.func @transform_5(%arg0: i32, %arg1: i32) -> (i32, i32, i32) {
    %c0_i32 = arith.constant 0 : i32
    %c0_i32_0 = arith.constant 0 : i32
    return %arg0, %arg1, %c0_i32 : i32, i32, i32
  }
}

</mosaic_0001>

<llo_original>
// kernel: tpu_custom_call.1
$region0: #{tpu_custom_call.1}
  #allocation0 [shape = 'u32[]', space=smem, size = 0x4, offset = 0x4, fixed_abs, tag = 'smem constant byte address 0x4 - core index']
  #allocation1 [shape = 'u32[144,128]{1,0:T(1,128)}', space=vmem, size = 0x12000, scoped, tag = 'internal scratch']
  #allocation2 [shape = 'f32[24,64]{1,0:T(8,128)}', space=vmem, size = 0x3000, scoped, tag = 'scratch operand']
  %s0 = inlined_call_operand.vmem [shape: f32[2,8,64], index: 0, kind: input, shape index: {}]
  %s1 = inlined_call_operand.vmem [shape: f32[4,64,32], index: 1, kind: input, shape index: {}]
  %s2 = inlined_call_operand.vmem [shape: f32[1,32], index: 2, kind: input, shape index: {}]
  %s3 = inlined_call_operand.vmem [shape: f32[1,32], index: 3, kind: input, shape index: {}]
  %s4 = inlined_call_operand.vmem [shape: f32[1,32], index: 4, kind: input, shape index: {}]
  %s5 = inlined_call_operand.hbm [shape: f32[2,8,32], index: 5, kind: output, shape index: {}]
  %s6 = sld [smem:[#allocation0]]
  $region53: #{tpu_custom_call.1} parent=0
    _
  %s8 = ssub.s32 1, %s6
  %s9 = scalar_select 0, %s8, %s6
  $region1: #{tpu_custom_call.1} parent=0
    #allocation3 [shape = 'u8[8192]{0}', space=vmem, size = 0x2000, scoped, tag = 'output window, operand 0']
    #allocation4 [shape = 's32[2]{0}', space=sflag, size = 0x8, scoped, tag = 'scoped memory for tpu_custom_call.1']
    %10 = vsyncpa [#allocation4], 0
    %s11 = scalar_lea.sflag [#allocation4], 1
    %12 = vsyncpa %s11, 0
    loop: start=0, step=1, limit=4
    $region2: #{tpu_custom_call.1} parent=1 // loop_pre_header
      _
    $region3: #{tpu_custom_call.1} parent=1 // loop_header
      %s14 = sphi 0, %s18
      %p15 = scmp.ge.s32.totalorder %s14, 4
      %s21 = sphi 0, %s33
      %s22 = sphi 0, %s29
      %s23 = sphi 0, %s21
      %s24 = sphi 0, %s22
      %s25 = sphi 0, %s23
      %s26 = sphi 0, %s24
      %s38 = sphi 0, %s40
      %s41 = sphi 0, %s38
      %s42 = sphi 0, %s41
      %s58 = sphi 0, %s42
      %s62 = sphi 0, %s62
      %s64 = sphi 0, %s62
      %s65 = sphi 0, %s64
      %s79 = sphi 0, %s65
      %s83 = sphi 0, %s83
      %s85 = sphi 0, %s83
      %s86 = sphi 0, %s85
      %s100 = sphi 0, %s86
      %s104 = sphi 0, %s104
      %s106 = sphi 0, %s104
      %s107 = sphi 0, %s106
      %s121 = sphi 0, %s107
      %s125 = sphi 0, %s125
      %s127 = sphi 0, %s125
      %s128 = sphi 0, %s127
      %s142 = sphi 0, %s128
      %s150 = sphi 0, %s152
      %s153 = sphi 0, %s150
      %s154 = sphi 0, %s153
      %s170 = sphi 0, %s154
    $region4: #{tpu_custom_call.1} parent=1 // loop_header_branch
      %17 = sbr.rel (%p15) target = $region8
    $region5: #{tpu_custom_call.1} parent=1 // loop_body
      %s19 = ssub.s32 %s14, 1
      %s20 = ssub.s32 %s14, 2
      %s27 = sadd.s32 1, %s22
      %p28 = scmp.ge.s32.totalorder %s27, 1
      %s29 = scalar_select %p28, 0, %s27
      %s30 = sadd.s32 1, %s21
      %s31 = scalar_select %p28, %s30, %s21
      %p32 = scmp.ge.s32.totalorder %s31, 2
      %s33 = scalar_select %p32, 0, %s31
      %s34 = ssub.s32 %s21, %s33
      %s35 = ssub.s32 %s22, %s29
      %s36 = sor.u32 %s34, %s35
      %p37 = scmp.eq.s32.totalorder %s36, 0
      %s39 = sadd.s32 %s38, 1
      %s40 = scalar_select %p37, %s38, %s39
      %p43 = pneg %p37
      %p44 = scmp.eq.s32.totalorder %s14, 1
      %p45 = por %p43, %p44
      %p46 = scmp.ne.s32.totalorder %s38, %s41
      %p47 = scmp.eq.s32.totalorder %s14, 0
      %p48 = por %p46, %p47
      %p49 = scmp.ne.s32.totalorder %s38, %s41
      %p50 = scmp.eq.s32.totalorder %s19, 1
      %p51 = por %p49, %p50
      %p52 = scmp.ne.s32.totalorder %s41, %s42
      %p53 = scmp.eq.s32.totalorder %s19, 0
      %p54 = por %p52, %p53
      %p55 = scmp.ne.s32.totalorder %s41, %s42
      %p56 = scmp.eq.s32.totalorder %s20, 1
      %p57 = por %p55, %p56
      %p59 = scmp.ne.s32.totalorder %s42, %s58
      %p60 = scmp.eq.s32.totalorder %s20, 0
      %p61 = por %p59, %p60
      %s63 = sadd.s32 %s62, 1
      %p66 = scmp.eq.s32.totalorder %s14, 1
      %p67 = scmp.ne.s32.totalorder %s62, %s64
      %p68 = scmp.eq.s32.totalorder %s14, 0
      %p69 = por %p67, %p68
      %p70 = scmp.ne.s32.totalorder %s62, %s64
      %p71 = scmp.eq.s32.totalorder %s19, 1
      %p72 = por %p70, %p71
      %p73 = scmp.ne.s32.totalorder %s64, %s65
      %p74 = scmp.eq.s32.totalorder %s19, 0
      %p75 = por %p73, %p74
      %p76 = scmp.ne.s32.totalorder %s64, %s65
      %p77 = scmp.eq.s32.totalorder %s20, 1
      %p78 = por %p76, %p77
      %p80 = scmp.ne.s32.totalorder %s65, %s79
      %p81 = scmp.eq.s32.totalorder %s20, 0
      %p82 = por %p80, %p81
      %s84 = sadd.s32 %s83, 1
      %p87 = scmp.eq.s32.totalorder %s14, 1
      %p88 = scmp.ne.s32.totalorder %s83, %s85
      %p89 = scmp.eq.s32.totalorder %s14, 0
      %p90 = por %p88, %p89
      %p91 = scmp.ne.s32.totalorder %s83, %s85
      %p92 = scmp.eq.s32.totalorder %s19, 1
      %p93 = por %p91, %p92
      %p94 = scmp.ne.s32.totalorder %s85, %s86
      %p95 = scmp.eq.s32.totalorder %s19, 0
      %p96 = por %p94, %p95
      %p97 = scmp.ne.s32.totalorder %s85, %s86
      %p98 = scmp.eq.s32.totalorder %s20, 1
      %p99 = por %p97, %p98
      %p101 = scmp.ne.s32.totalorder %s86, %s100
      %p102 = scmp.eq.s32.totalorder %s20, 0
      %p103 = por %p101, %p102
      %s105 = sadd.s32 %s104, 1
      %p108 = scmp.eq.s32.totalorder %s14, 1
      %p109 = scmp.ne.s32.totalorder %s104, %s106
      %p110 = scmp.eq.s32.totalorder %s14, 0
      %p111 = por %p109, %p110
      %p112 = scmp.ne.s32.totalorder %s104, %s106
      %p113 = scmp.eq.s32.totalorder %s19, 1
      %p114 = por %p112, %p113
      %p115 = scmp.ne.s32.totalorder %s106, %s107
      %p116 = scmp.eq.s32.totalorder %s19, 0
      %p117 = por %p115, %p116
      %p118 = scmp.ne.s32.totalorder %s106, %s107
      %p119 = scmp.eq.s32.totalorder %s20, 1
      %p120 = por %p118, %p119
      %p122 = scmp.ne.s32.totalorder %s107, %s121
      %p123 = scmp.eq.s32.totalorder %s20, 0
      %p124 = por %p122, %p123
      %s126 = sadd.s32 %s125, 1
      %p129 = scmp.eq.s32.totalorder %s14, 1
      %p130 = scmp.ne.s32.totalorder %s125, %s127
      %p131 = scmp.eq.s32.totalorder %s14, 0
      %p132 = por %p130, %p131
      %p133 = scmp.ne.s32.totalorder %s125, %s127
      %p134 = scmp.eq.s32.totalorder %s19, 1
      %p135 = por %p133, %p134
      %p136 = scmp.ne.s32.totalorder %s127, %s128
      %p137 = scmp.eq.s32.totalorder %s19, 0
      %p138 = por %p136, %p137
      %p139 = scmp.ne.s32.totalorder %s127, %s128
      %p140 = scmp.eq.s32.totalorder %s20, 1
      %p141 = por %p139, %p140
      %p143 = scmp.ne.s32.totalorder %s128, %s142
      %p144 = scmp.eq.s32.totalorder %s20, 0
      %p145 = por %p143, %p144
      %s146 = ssub.s32 %s21, %s33
      %s147 = ssub.s32 %s22, %s29
      %s148 = sor.u32 %s146, %s147
      %p149 = scmp.eq.s32.totalorder %s148, 0
      %s151 = sadd.s32 %s150, 1
      %s152 = scalar_select %p149, %s150, %s151
      %p155 = pneg %p149
      %p156 = scmp.eq.s32.totalorder %s14, 1
      %p157 = por %p155, %p156
      %p158 = scmp.ne.s32.totalorder %s150, %s153
      %p159 = scmp.eq.s32.totalorder %s14, 0
      %p160 = por %p158, %p159
      %p161 = scmp.ne.s32.totalorder %s150, %s153
      %p162 = scmp.eq.s32.totalorder %s19, 1
      %p163 = por %p161, %p162
      %p164 = scmp.ne.s32.totalorder %s153, %s154
      %p165 = scmp.eq.s32.totalorder %s19, 0
      %p166 = por %p164, %p165
      %p167 = scmp.ne.s32.totalorder %s153, %s154
      %p168 = scmp.eq.s32.totalorder %s20, 1
      %p169 = por %p167, %p168
      %p171 = scmp.ne.s32.totalorder %s154, %s170
      %p172 = scmp.eq.s32.totalorder %s20, 0
      %p173 = por %p171, %p172
      %p174 = scmp.le.s32.totalorder 1, %s14
      %p175 = scmp.lt.s32.totalorder %s14, 3
      %p176 = pnand %p174, %p175
      %p177 = pneg %p176
      // Predicated region
      $region9: #{tpu_custom_call.1} parent=5 // pred_check
        _
      $region10: #{tpu_custom_call.1} parent=5 // pred_check_branch
        %179 = sbr.rel (%p176) target = $region12
      $region11: #{tpu_custom_call.1} parent=5 // pred_region
        %s180 = ssub.s32 %s14, 1
        // Predicated region
        $region13: #{tpu_custom_call.1} parent=11 // pred_check
          %p181 = pneg %p75
        $region14: #{tpu_custom_call.1} parent=11 // pred_check_branch
          %183 = sbr.rel (%p181) target = $region16
        $region15: #{tpu_custom_call.1} parent=11 // pred_region
          _
        $region16: #{tpu_custom_call.1} parent=11 // pred_fallthru
          _
        // Predicated region
        $region17: #{tpu_custom_call.1} parent=11 // pred_check
          %p184 = pneg %p96
        $region18: #{tpu_custom_call.1} parent=11 // pred_check_branch
          %186 = sbr.rel (%p184) target = $region20
        $region19: #{tpu_custom_call.1} parent=11 // pred_region
          _
        $region20: #{tpu_custom_call.1} parent=11 // pred_fallthru
          _
        // Predicated region
        $region21: #{tpu_custom_call.1} parent=11 // pred_check
          %p187 = pneg %p117
        $region22: #{tpu_custom_call.1} parent=11 // pred_check_branch
          %189 = sbr.rel (%p187) target = $region24
        $region23: #{tpu_custom_call.1} parent=11 // pred_region
          _
        $region24: #{tpu_custom_call.1} parent=11 // pred_fallthru
          _
        // Predicated region
        $region25: #{tpu_custom_call.1} parent=11 // pred_check
          %p190 = pneg %p138
        $region26: #{tpu_custom_call.1} parent=11 // pred_check_branch
          %192 = sbr.rel (%p190) target = $region28
        $region27: #{tpu_custom_call.1} parent=11 // pred_region
          _
        $region28: #{tpu_custom_call.1} parent=11 // pred_fallthru
          _
      $region12: #{tpu_custom_call.1} parent=5 // pred_fallthru
        _
      %p193 = scmp.lt.s32.totalorder %s14, 2
      // Predicated region
      $region29: #{tpu_custom_call.1} parent=5 // pred_check
        %p194 = pneg %p193
      $region30: #{tpu_custom_call.1} parent=5 // pred_check_branch
        %196 = sbr.rel (%p194) target = $region32
      $region31: #{tpu_custom_call.1} parent=5 // pred_region
        // Predicated region
        $region33: #{tpu_custom_call.1} parent=31 // pred_check
          %p197 = pneg %p48
        $region34: #{tpu_custom_call.1} parent=31 // pred_check_branch
          %199 = sbr.rel (%p197) target = $region36
        $region35: #{tpu_custom_call.1} parent=31 // pred_region
          %p200 = scmp.lt.s32.totalorder %s21, 1
          %s201 = scalar_select %p200, %s21, 1
          %p202 = scmp.lt.s32.totalorder %s22, 0
          %s203 = scalar_select %p202, %s22, 0
          %s204 = sadd.s32 %s203, %s201
          %s205 = smul.addr %s204, 8
          %s206 = scalar_lea.vmem %s0, %s205
        $region36: #{tpu_custom_call.1} parent=31 // pred_fallthru
          _
      $region32: #{tpu_custom_call.1} parent=5 // pred_fallthru
        _
      %p207 = scmp.le.s32.totalorder 1, %s14
      %p208 = scmp.lt.s32.totalorder %s14, 3
      %p209 = pnand %p207, %p208
      %p210 = pneg %p209
      // Predicated region
      $region37: #{tpu_custom_call.1} parent=5 // pred_check
        _
      $region38: #{tpu_custom_call.1} parent=5 // pred_check_branch
        %212 = sbr.rel (%p209) target = $region40
      $region39: #{tpu_custom_call.1} parent=5 // pred_region
        %s213 = ssub.s32 %s14, 1
        %p214 = scmp.lt.s32.totalorder %s23, 1
        %s215 = scalar_select %p214, %s23, 1
        %p216 = scmp.lt.s32.totalorder %s24, 0
        %s217 = scalar_select %p216, %s24, 0
        %s218 = sadd.s32 %s217, %s215
        %s219 = smul.addr %s218, 8
        %s220 = scalar_lea.vmem %s0, %s219
        %p221 = pneg %p54
        %p222 = pneg %p51
        %p223 = pneg %p75
        %p224 = pneg %p72
        %p225 = pneg %p96
        %p226 = pneg %p93
        %p227 = pneg %p117
        %p228 = pneg %p114
        %p229 = pneg %p138
        %p230 = pneg %p135
        %p231 = pneg %p166
        %p232 = pneg %p163
        %s233 = sand.u32 %s153, 1
        %s234 = scalar_lea.sflag [#allocation4], %s233
        %s235 = sand.u32 %s153, 1
        %s236 = smul.addr %s235, 8
        %s237 = scalar_lea.vmem [#allocation3], %s236
        %p238 = scmp.lt.s32.totalorder %s23, 1
        %s239 = scalar_select %p238, %s23, 1
        %p240 = scmp.lt.s32.totalorder %s24, 0
        %s241 = scalar_select %p240, %s24, 0
        %s242 = sadd.s32 %s241, %s239
        %s243 = smul.addr %s242, 8
        %s244 = scalar_lea.vmem %s0, %s243
        %v245 = vld [vmem:[%s244] sm:$0xff]
        %vm246 = vcmask 523264
        %247 = vst.msk [vmem:[#allocation2 + $0x8] sm:$0xff] %vm246, %v245
        %248 = vst.msk [vmem:[#allocation2] sm:$0xff] %vm246, 0.0
        %249 = vst.msk [vmem:[#allocation2 + $0x10] sm:$0xff] %vm246, 0.0
        %v250 = vld [vmem:[#allocation2 + $0x7] sm:$0xff]
        %v251 = vld [vmem:[%s1] sm:$0xff]
        %v252 = vld [vmem:[%s1 + $0x8] sm:$0xff]
        %v253 = vld [vmem:[%s1 + $0x10] sm:$0xff]
        %v254 = vld [vmem:[%s1 + $0x18] sm:$0xff]
        %v255 = vld [vmem:[%s1 + $0x20] sm:$0xff]
        %v256 = vld [vmem:[%s1 + $0x28] sm:$0xff]
        %v257 = vld [vmem:[%s1 + $0x30] sm:$0xff]
        %v258 = vld [vmem:[%s1 + $0x38] sm:$0xff]
        %v259 = vld [vmem:[#allocation2 + $0x8] sm:$0xff]
        %s260 = scalar_lea.vmem %s1, 64
        %v261 = vld [vmem:[%s260] sm:$0xff]
        %v262 = vld [vmem:[%s260 + $0x8] sm:$0xff]
        %v263 = vld [vmem:[%s260 + $0x10] sm:$0xff]
        %v264 = vld [vmem:[%s260 + $0x18] sm:$0xff]
        %v265 = vld [vmem:[%s260 + $0x20] sm:$0xff]
        %v266 = vld [vmem:[%s260 + $0x28] sm:$0xff]
        %v267 = vld [vmem:[%s260 + $0x30] sm:$0xff]
        %v268 = vld [vmem:[%s260 + $0x38] sm:$0xff]
        %v270 = vsel %vm246, %v259, 0
        %272 = vmatprep.subr.mxu0 0.0
        %273 = vmatpush1.msra.mxu0 %v261
        %274 = vmatprep.subr.mxu0 0.0
        %275 = vmatpush1.msra.mxu0 %v262
        %276 = vmatprep.subr.mxu0 0.0
        %277 = vmatpush1.msra.mxu0 %v263
        %278 = vmatprep.subr.mxu0 0.0
        %279 = vmatpush1.msra.mxu0 %v264
        %280 = vmatprep.subr.mxu0 0.0
        %281 = vmatpush1.msra.mxu0 %v265
        %282 = vmatprep.subr.mxu0 0.0
        %283 = vmatpush1.msra.mxu0 %v266
        %284 = vmatprep.subr.mxu0 0.0
        %285 = vmatpush1.msra.mxu0 %v267
        %286 = vmatprep.subr.mxu0 0.0
        %287 = vmatpush1.msra.mxu0 %v268
        %288 = vmatprep.subr.mxu0 0.0
        %289 = vmatpush1.msra.mxu0 0.0
        %290 = vmatprep.subr.mxu0 0.0
        %291 = vmatpush1.msra.mxu0 0.0
        %292 = vmatprep.subr.mxu0 0.0
        %293 = vmatpush1.msra.mxu0 0.0
        %294 = vmatprep.subr.mxu0 0.0
        %295 = vmatpush1.msra.mxu0 0.0
        %296 = vmatprep.subr.mxu0 0.0
        %297 = vmatpush1.msra.mxu0 0.0
        %298 = vmatprep.subr.mxu0 0.0
        %299 = vmatpush1.msra.mxu0 0.0
        %300 = vmatprep.subr.mxu0 0.0
        %301 = vmatpush1.msra.mxu0 0.0
        %302 = vmatprep.subr.mxu0 0.0
        %303 = vmatpush1.msra.mxu0 0.0
        %304 = vmatprep.subr.mxu0 0.0
        %305 = vmatpush1.msra.mxu0 0.0
        %306 = vmatprep.subr.mxu0 0.0
        %307 = vmatpush1.msra.mxu0 0.0
        %308 = vmatprep.subr.mxu0 0.0
        %309 = vmatpush1.msra.mxu0 0.0
        %310 = vmatprep.subr.mxu0 0.0
        %311 = vmatpush1.msra.mxu0 0.0
        %312 = vmatprep.subr.mxu0 0.0
        %313 = vmatpush1.msra.mxu0 0.0
        %314 = vmatprep.subr.mxu0 0.0
        %315 = vmatpush1.msra.mxu0 0.0
        %316 = vmatprep.subr.mxu0 0.0
        %317 = vmatpush1.msra.mxu0 0.0
        %318 = vmatprep.subr.mxu0 0.0
        %319 = vmatpush1.msra.mxu0 0.0
        %320 = vmatprep.subr.mxu0 0.0
        %321 = vmatpush1.msra.mxu0 0.0
        %322 = vmatprep.subr.mxu0 0.0
        %323 = vmatpush1.msra.mxu0 0.0
        %324 = vmatprep.subr.mxu0 0.0
        %325 = vmatpush1.msra.mxu0 0.0
        %326 = vmatprep.subr.mxu0 0.0
        %327 = vmatpush1.msra.mxu0 0.0
        %328 = vmatprep.subr.mxu0 0.0
        %329 = vmatpush1.msra.mxu0 0.0
        %330 = vmatprep.subr.mxu0 0.0
        %331 = vmatpush1.msra.mxu0 0.0
        %332 = vmatprep.subr.mxu0 0.0
        %333 = vmatpush1.msra.mxu0 0.0
        %334 = vmatprep.subr.mxu0 0.0
        %335 = vmatpush1.msra.mxu0 0.0
        %336 = vmatprep.mubr.f32.mxu0 0.0
        %337 = vmatmul.mubr.f32.gmra.mrb[0].mxu0 %v270
        %v338 = vpop.f32.mrb[0].mxu0
        %v339 = vadd.f32 0.0, %v338
        %v340 = vpop.f32.mrb[0].mxu0
        %341 = vdwg.mxu0
        %v343 = vsel %vm246, %v250, 0
        %345 = vmatprep.subr.mxu0 0.0
        %346 = vmatpush1.msra.mxu0 %v251
        %347 = vmatprep.subr.mxu0 0.0
        %348 = vmatpush1.msra.mxu0 %v252
        %349 = vmatprep.subr.mxu0 0.0
        %350 = vmatpush1.msra.mxu0 %v253
        %351 = vmatprep.subr.mxu0 0.0
        %352 = vmatpush1.msra.mxu0 %v254
        %353 = vmatprep.subr.mxu0 0.0
        %354 = vmatpush1.msra.mxu0 %v255
        %355 = vmatprep.subr.mxu0 0.0
        %356 = vmatpush1.msra.mxu0 %v256
        %357 = vmatprep.subr.mxu0 0.0
        %358 = vmatpush1.msra.mxu0 %v257
        %359 = vmatprep.subr.mxu0 0.0
        %360 = vmatpush1.msra.mxu0 %v258
        %361 = vmatprep.subr.mxu0 0.0
        %362 = vmatpush1.msra.mxu0 0.0
        %363 = vmatprep.subr.mxu0 0.0
        %364 = vmatpush1.msra.mxu0 0.0
        %365 = vmatprep.subr.mxu0 0.0
        %366 = vmatpush1.msra.mxu0 0.0
        %367 = vmatprep.subr.mxu0 0.0
        %368 = vmatpush1.msra.mxu0 0.0
        %369 = vmatprep.subr.mxu0 0.0
        %370 = vmatpush1.msra.mxu0 0.0
        %371 = vmatprep.subr.mxu0 0.0
        %372 = vmatpush1.msra.mxu0 0.0
        %373 = vmatprep.subr.mxu0 0.0
        %374 = vmatpush1.msra.mxu0 0.0
        %375 = vmatprep.subr.mxu0 0.0
        %376 = vmatpush1.msra.mxu0 0.0
        %377 = vmatprep.subr.mxu0 0.0
        %378 = vmatpush1.msra.mxu0 0.0
        %379 = vmatprep.subr.mxu0 0.0
        %380 = vmatpush1.msra.mxu0 0.0
        %381 = vmatprep.subr.mxu0 0.0
        %382 = vmatpush1.msra.mxu0 0.0
        %383 = vmatprep.subr.mxu0 0.0
        %384 = vmatpush1.msra.mxu0 0.0
        %385 = vmatprep.subr.mxu0 0.0
        %386 = vmatpush1.msra.mxu0 0.0
        %387 = vmatprep.subr.mxu0 0.0
        %388 = vmatpush1.msra.mxu0 0.0
        %389 = vmatprep.subr.mxu0 0.0
        %390 = vmatpush1.msra.mxu0 0.0
        %391 = vmatprep.subr.mxu0 0.0
        %392 = vmatpush1.msra.mxu0 0.0
        %393 = vmatprep.subr.mxu0 0.0
        %394 = vmatpush1.msra.mxu0 0.0
        %395 = vmatprep.subr.mxu0 0.0
        %396 = vmatpush1.msra.mxu0 0.0
        %397 = vmatprep.subr.mxu0 0.0
        %398 = vmatpush1.msra.mxu0 0.0
        %399 = vmatprep.subr.mxu0 0.0
        %400 = vmatpush1.msra.mxu0 0.0
        %401 = vmatprep.subr.mxu0 0.0
        %402 = vmatpush1.msra.mxu0 0.0
        %403 = vmatprep.subr.mxu0 0.0
        %404 = vmatpush1.msra.mxu0 0.0
        %405 = vmatprep.subr.mxu0 0.0
        %406 = vmatpush1.msra.mxu0 0.0
        %407 = vmatprep.subr.mxu0 0.0
        %408 = vmatpush1.msra.mxu0 0.0
        %409 = vmatprep.mubr.f32.mxu0 0.0
        %410 = vmatmul.mubr.f32.gmra.mrb[0].mxu0 %v343
        %v411 = vpop.f32.mrb[0].mxu0
        %v412 = vadd.f32 %v339, %v411
        %v413 = vpop.f32.mrb[0].mxu0
        %414 = vdwg.mxu0
        %v415 = vld [vmem:[#allocation2 + $0x9] sm:$0xff]
        %s416 = scalar_lea.vmem %s1, 128
        %v417 = vld [vmem:[%s416] sm:$0xff]
        %v418 = vld [vmem:[%s416 + $0x8] sm:$0xff]
        %v419 = vld [vmem:[%s416 + $0x10] sm:$0xff]
        %v420 = vld [vmem:[%s416 + $0x18] sm:$0xff]
        %v421 = vld [vmem:[%s416 + $0x20] sm:$0xff]
        %v422 = vld [vmem:[%s416 + $0x28] sm:$0xff]
        %v423 = vld [vmem:[%s416 + $0x30] sm:$0xff]
        %v424 = vld [vmem:[%s416 + $0x38] sm:$0xff]
        %v426 = vsel %vm246, %v415, 0
        %428 = vmatprep.subr.mxu0 0.0
        %429 = vmatpush1.msra.mxu0 %v417
        %430 = vmatprep.subr.mxu0 0.0
        %431 = vmatpush1.msra.mxu0 %v418
        %432 = vmatprep.subr.mxu0 0.0
        %433 = vmatpush1.msra.mxu0 %v419
        %434 = vmatprep.subr.mxu0 0.0
        %435 = vmatpush1.msra.mxu0 %v420
        %436 = vmatprep.subr.mxu0 0.0
        %437 = vmatpush1.msra.mxu0 %v421
        %438 = vmatprep.subr.mxu0 0.0
        %439 = vmatpush1.msra.mxu0 %v422
        %440 = vmatprep.subr.mxu0 0.0
        %441 = vmatpush1.msra.mxu0 %v423
        %442 = vmatprep.subr.mxu0 0.0
        %443 = vmatpush1.msra.mxu0 %v424
        %444 = vmatprep.subr.mxu0 0.0
        %445 = vmatpush1.msra.mxu0 0.0
        %446 = vmatprep.subr.mxu0 0.0
        %447 = vmatpush1.msra.mxu0 0.0
        %448 = vmatprep.subr.mxu0 0.0
        %449 = vmatpush1.msra.mxu0 0.0
        %450 = vmatprep.subr.mxu0 0.0
        %451 = vmatpush1.msra.mxu0 0.0
        %452 = vmatprep.subr.mxu0 0.0
        %453 = vmatpush1.msra.mxu0 0.0
        %454 = vmatprep.subr.mxu0 0.0
        %455 = vmatpush1.msra.mxu0 0.0
        %456 = vmatprep.subr.mxu0 0.0
        %457 = vmatpush1.msra.mxu0 0.0
        %458 = vmatprep.subr.mxu0 0.0
        %459 = vmatpush1.msra.mxu0 0.0
        %460 = vmatprep.subr.mxu0 0.0
        %461 = vmatpush1.msra.mxu0 0.0
        %462 = vmatprep.subr.mxu0 0.0
        %463 = vmatpush1.msra.mxu0 0.0
        %464 = vmatprep.subr.mxu0 0.0
        %465 = vmatpush1.msra.mxu0 0.0
        %466 = vmatprep.subr.mxu0 0.0
        %467 = vmatpush1.msra.mxu0 0.0
        %468 = vmatprep.subr.mxu0 0.0
        %469 = vmatpush1.msra.mxu0 0.0
        %470 = vmatprep.subr.mxu0 0.0
        %471 = vmatpush1.msra.mxu0 0.0
        %472 = vmatprep.subr.mxu0 0.0
        %473 = vmatpush1.msra.mxu0 0.0
        %474 = vmatprep.subr.mxu0 0.0
        %475 = vmatpush1.msra.mxu0 0.0
        %476 = vmatprep.subr.mxu0 0.0
        %477 = vmatpush1.msra.mxu0 0.0
        %478 = vmatprep.subr.mxu0 0.0
        %479 = vmatpush1.msra.mxu0 0.0
        %480 = vmatprep.subr.mxu0 0.0
        %481 = vmatpush1.msra.mxu0 0.0
        %482 = vmatprep.subr.mxu0 0.0
        %483 = vmatpush1.msra.mxu0 0.0
        %484 = vmatprep.subr.mxu0 0.0
        %485 = vmatpush1.msra.mxu0 0.0
        %486 = vmatprep.subr.mxu0 0.0
        %487 = vmatpush1.msra.mxu0 0.0
        %488 = vmatprep.subr.mxu0 0.0
        %489 = vmatpush1.msra.mxu0 0.0
        %490 = vmatprep.subr.mxu0 0.0
        %491 = vmatpush1.msra.mxu0 0.0
        %492 = vmatprep.mubr.f32.mxu0 0.0
        %493 = vmatmul.mubr.f32.gmra.mrb[0].mxu0 %v426
        %v494 = vpop.f32.mrb[0].mxu0
        %v495 = vadd.f32 0.0, %v494
        %v496 = vpop.f32.mrb[0].mxu0
        %497 = vdwg.mxu0
        %v498 = vadd.f32 %v412, %v495
        %v499 = vld [vmem:[#allocation2 + $0xa] sm:$0xff]
        %s500 = scalar_lea.vmem %s1, 192
        %v501 = vld [vmem:[%s500] sm:$0xff]
        %v502 = vld [vmem:[%s500 + $0x8] sm:$0xff]
        %v503 = vld [vmem:[%s500 + $0x10] sm:$0xff]
        %v504 = vld [vmem:[%s500 + $0x18] sm:$0xff]
        %v505 = vld [vmem:[%s500 + $0x20] sm:$0xff]
        %v506 = vld [vmem:[%s500 + $0x28] sm:$0xff]
        %v507 = vld [vmem:[%s500 + $0x30] sm:$0xff]
        %v508 = vld [vmem:[%s500 + $0x38] sm:$0xff]
        %v510 = vsel %vm246, %v499, 0
        %512 = vmatprep.subr.mxu0 0.0
        %513 = vmatpush1.msra.mxu0 %v501
        %514 = vmatprep.subr.mxu0 0.0
        %515 = vmatpush1.msra.mxu0 %v502
        %516 = vmatprep.subr.mxu0 0.0
        %517 = vmatpush1.msra.mxu0 %v503
        %518 = vmatprep.subr.mxu0 0.0
        %519 = vmatpush1.msra.mxu0 %v504
        %520 = vmatprep.subr.mxu0 0.0
        %521 = vmatpush1.msra.mxu0 %v505
        %522 = vmatprep.subr.mxu0 0.0
        %523 = vmatpush1.msra.mxu0 %v506
        %524 = vmatprep.subr.mxu0 0.0
        %525 = vmatpush1.msra.mxu0 %v507
        %526 = vmatprep.subr.mxu0 0.0
        %527 = vmatpush1.msra.mxu0 %v508
        %528 = vmatprep.subr.mxu0 0.0
        %529 = vmatpush1.msra.mxu0 0.0
        %530 = vmatprep.subr.mxu0 0.0
        %531 = vmatpush1.msra.mxu0 0.0
        %532 = vmatprep.subr.mxu0 0.0
        %533 = vmatpush1.msra.mxu0 0.0
        %534 = vmatprep.subr.mxu0 0.0
        %535 = vmatpush1.msra.mxu0 0.0
        %536 = vmatprep.subr.mxu0 0.0
        %537 = vmatpush1.msra.mxu0 0.0
        %538 = vmatprep.subr.mxu0 0.0
        %539 = vmatpush1.msra.mxu0 0.0
        %540 = vmatprep.subr.mxu0 0.0
        %541 = vmatpush1.msra.mxu0 0.0
        %542 = vmatprep.subr.mxu0 0.0
        %543 = vmatpush1.msra.mxu0 0.0
        %544 = vmatprep.subr.mxu0 0.0
        %545 = vmatpush1.msra.mxu0 0.0
        %546 = vmatprep.subr.mxu0 0.0
        %547 = vmatpush1.msra.mxu0 0.0
        %548 = vmatprep.subr.mxu0 0.0
        %549 = vmatpush1.msra.mxu0 0.0
        %550 = vmatprep.subr.mxu0 0.0
        %551 = vmatpush1.msra.mxu0 0.0
        %552 = vmatprep.subr.mxu0 0.0
        %553 = vmatpush1.msra.mxu0 0.0
        %554 = vmatprep.subr.mxu0 0.0
        %555 = vmatpush1.msra.mxu0 0.0
        %556 = vmatprep.subr.mxu0 0.0
        %557 = vmatpush1.msra.mxu0 0.0
        %558 = vmatprep.subr.mxu0 0.0
        %559 = vmatpush1.msra.mxu0 0.0
        %560 = vmatprep.subr.mxu0 0.0
        %561 = vmatpush1.msra.mxu0 0.0
        %562 = vmatprep.subr.mxu0 0.0
        %563 = vmatpush1.msra.mxu0 0.0
        %564 = vmatprep.subr.mxu0 0.0
        %565 = vmatpush1.msra.mxu0 0.0
        %566 = vmatprep.subr.mxu0 0.0
        %567 = vmatpush1.msra.mxu0 0.0
        %568 = vmatprep.subr.mxu0 0.0
        %569 = vmatpush1.msra.mxu0 0.0
        %570 = vmatprep.subr.mxu0 0.0
        %571 = vmatpush1.msra.mxu0 0.0
        %572 = vmatprep.subr.mxu0 0.0
        %573 = vmatpush1.msra.mxu0 0.0
        %574 = vmatprep.subr.mxu0 0.0
        %575 = vmatpush1.msra.mxu0 0.0
        %576 = vmatprep.mubr.f32.mxu0 0.0
        %577 = vmatmul.mubr.f32.gmra.mrb[0].mxu0 %v510
        %v578 = vpop.f32.mrb[0].mxu0
        %v579 = vadd.f32 0.0, %v578
        %v580 = vpop.f32.mrb[0].mxu0
        %581 = vdwg.mxu0
        %v582 = vadd.f32 %v498, %v579
        %v583 = vld [vmem:[%s2] sm:$0x1]
        %v585 = vlaneseq
        %v586 = vshrl.u32 %v585, 7
        %v587 = vsub.s32 0, %v586
        %v588 = vrot.slane %v583, %v587
        %v590 = vadd.f32 %v582, %v588
        %v591 = vxor.u32 %v590, 2147483648
        %v592 = vmul.f32 %v591, 1.442695
        %v593 = vpow.pop %v592
        %v594 = vadd.f32 %v593, 1.0
        %v595 = vrcp.pop %v594
        %v596 = vmul.f32 1.0, %v595
        %v597 = vmul.f32 %v590, %v596
        %vm598 = vcmask 261120
        %v599 = vsel %vm598, %v597, 0.0
        %600 = vadd.xlane.f32.xlu0 %v599
        %v601 = vpop.xlane.xlu0 %600
        %v602 = vrcp.pop 32.0
        %v603 = vmul.f32 %v601, %v602
        %v604 = vsub.f32 %v597, %v603
        %v605 = vmul.f32 %v604, %v604
        %v606 = vsel %vm598, %v605, 0.0
        %607 = vadd.xlane.f32.xlu0 %v606
        %v608 = vpop.xlane.xlu0 %607
        %v609 = vmul.f32 %v608, %v602
        %v610 = vadd.f32 %v609, 1e-12
        %v611 = vrsqrt.pop %v610
        %v612 = vmul.f32 %v604, %v611
        %v613 = vld [vmem:[%s3] sm:$0x1]
        %v615 = vlaneseq
        %v616 = vshrl.u32 %v615, 7
        %v617 = vsub.s32 0, %v616
        %v618 = vrot.slane %v613, %v617
        %v620 = vmul.f32 %v612, %v618
        %v621 = vld [vmem:[%s4] sm:$0x1]
        %v623 = vlaneseq
        %v624 = vshrl.u32 %v623, 7
        %v625 = vsub.s32 0, %v624
        %v626 = vrot.slane %v621, %v625
        %v628 = vadd.f32 %v620, %v626
        %629 = vst.msk [vmem:[%s237] sm:$0xff] %vm598, %v628
        %s630 = sand.u32 %s153, 1
        %s631 = scalar_lea.sflag [#allocation4], %s630
        %s632 = sand.u32 %s153, 1
        %s633 = smul.addr %s632, 8
        %s634 = scalar_lea.vmem [#allocation3], %s633
        // Predicated region
        $region41: #{tpu_custom_call.1} parent=39 // pred_check
          %p635 = pneg %p163
        $region42: #{tpu_custom_call.1} parent=39 // pred_check_branch
          %637 = sbr.rel (%p635) target = $region44
        $region43: #{tpu_custom_call.1} parent=39 // pred_region
          %s639 = ssub.s32 128, 128
          %640 = vsyncadd %s631, %s639
          %s641 = sadd.s32 %s24, %s23
          %s642 = smul.addr %s641, 128
          %s643 = scalar_lea.hbm %s5, %s642
          %s645 = sshll.u32 %s634, 4
          %s646 = int_to_ptr.vmem [resolvable:$true] %s645
          %648 = dma.vmem_to_hbm [thread:$0]  %s646, 128, %s643, %s631
        $region44: #{tpu_custom_call.1} parent=39 // pred_fallthru
          _
      $region40: #{tpu_custom_call.1} parent=5 // pred_fallthru
        _
      %p649 = scmp.le.s32.totalorder 2, %s14
      // Predicated region
      $region45: #{tpu_custom_call.1} parent=5 // pred_check
        %p650 = pneg %p649
      $region46: #{tpu_custom_call.1} parent=5 // pred_check_branch
        %652 = sbr.rel (%p650) target = $region48
      $region47: #{tpu_custom_call.1} parent=5 // pred_region
        %s653 = ssub.s32 %s14, 2
        // Predicated region
        $region49: #{tpu_custom_call.1} parent=47 // pred_check
          %p654 = pneg %p169
        $region50: #{tpu_custom_call.1} parent=47 // pred_check_branch
          %656 = sbr.rel (%p654) target = $region52
        $region51: #{tpu_custom_call.1} parent=47 // pred_region
          %s657 = sand.u32 %s154, 1
          %s658 = scalar_lea.sflag [#allocation4], %s657
          %s659 = sand.u32 %s154, 1
          %s660 = smul.addr %s659, 8
          %s661 = scalar_lea.vmem [#allocation3], %s660
          %662 = dma.done %s658, 128
        $region52: #{tpu_custom_call.1} parent=47 // pred_fallthru
          _
      $region48: #{tpu_custom_call.1} parent=5 // pred_fallthru
        _
    $region6: #{tpu_custom_call.1} parent=1 // loop_footer
      %s18 = sadd.s32 1, %s14
    $region7: #{tpu_custom_call.1} parent=1 // loop_footer_branch
      %13 = sbr.rel target = $region3
    $region8: #{tpu_custom_call.1} parent=1 // loop_exit
      _
    %663 = vsyncpa [#allocation4], 1
    %s664 = scalar_lea.sflag [#allocation4], 1
    %665 = vsyncpa %s664, 1

</llo_original>
